<compile_context>
chip_gen: v7x
topology: tpu7x:2x2x1
jax: 0.10.0
libtpu: 0.0.40
codegen_flags: <defaults>
</compile_context>

<pallas_src>
from abc import ABC, abstractmethod

import numpy as np
import jax
import jax.numpy as jnp
from jax.experimental import pallas as pl
from jax.experimental.pallas import tpu as pltpu

FMAP_BASE = 8192
FMAP_MAX = 512

# Tiling constants: lane-dense last dim, generation-safe tile footprint.
_LANE = 1024          # multiple of 128 -> unmasked full-lane stores
_BLOCK_ROWS = 512     # (512, 1024) f32 tile = 2 MiB; 12 MiB pipelined (fits v5e)


# ----------------------------------------------------------------------------
# Pallas kernel: fade-in blend  out = alpha * x_new + (1 - alpha) * x_old
# ----------------------------------------------------------------------------
def _fade_in_kernel(alpha_ref, x_new_ref, x_old_ref, o_ref):
    # alpha_ref is a float32 scalar in SMEM; x_* / o_ refs are VMEM tiles.
    a = alpha_ref[0]
    x_new = x_new_ref[...]
    x_old = x_old_ref[...]
    # f32 scalar * (possibly bf16) tensor promotes to f32 on the VPU; cast back.
    o_ref[...] = (a * x_new + (1.0 - a) * x_old).astype(o_ref.dtype)


def fade_in_blend(x_new: jax.Array, x_old: jax.Array, alpha: float) -> jax.Array:
    """ProGAN fade-in blend on NCHW tensors via a tiled, lane-dense Pallas kernel."""
    assert x_new.shape == x_old.shape
    assert x_new.dtype == x_old.dtype
    orig_shape = x_new.shape
    dtype = x_new.dtype
    itemsize = jnp.dtype(dtype).itemsize
    total = int(np.prod(orig_shape))

    # Sublane packing: 8 for 32-bit, 16 for 16-bit, 32 for 8-bit dtypes.
    sub_mult = 8 * max(1, 4 // itemsize)

    # Flatten fully and re-pack into a lane-dense 2D slab (rows, _LANE).
    rows = -(-total // _LANE)
    block_rows = min(_BLOCK_ROWS, ((rows + sub_mult - 1) // sub_mult) * sub_mult)
    padded_rows = ((rows + block_rows - 1) // block_rows) * block_rows
    padded_total = padded_rows * _LANE

    xf_new = x_new.reshape(-1)
    xf_old = x_old.reshape(-1)
    if padded_total != total:
        pad = padded_total - total
        xf_new = jnp.pad(xf_new, (0, pad))
        xf_old = jnp.pad(xf_old, (0, pad))
    x2_new = xf_new.reshape(padded_rows, _LANE)
    x2_old = xf_old.reshape(padded_rows, _LANE)

    # alpha stays float32 in SMEM regardless of tensor dtype (no quantization).
    alpha_arr = jnp.asarray([alpha], dtype=jnp.float32)

    grid = (padded_rows // block_rows,)

    out2 = pl.pallas_call(
        _fade_in_kernel,
        out_shape=jax.ShapeDtypeStruct((padded_rows, _LANE), dtype),
        grid=grid,
        in_specs=[
            pl.BlockSpec(memory_space=pltpu.MemorySpace.SMEM),        # alpha scalar
            pl.BlockSpec((block_rows, _LANE), lambda i: (i, 0)),       # x_new tile
            pl.BlockSpec((block_rows, _LANE), lambda i: (i, 0)),       # x_old tile
        ],
        out_specs=pl.BlockSpec((block_rows, _LANE), lambda i: (i, 0)),
        compiler_params=pltpu.CompilerParams(
            dimension_semantics=("parallel",)),
        cost_estimate=pl.CostEstimate(
            flops=3 * padded_total,
            transcendentals=0,
            bytes_accessed=3 * padded_total * itemsize),
    )(alpha_arr, x2_new, x2_old)

    return out2.reshape(-1)[:total].reshape(orig_shape)


# ----------------------------------------------------------------------------
# ProGAN base class: exact port of the metadata/state machine.
# ----------------------------------------------------------------------------
class ProGAN(ABC):
    """Tracks metadata defining the current state of the ProGAN model."""

    _alpha = 1
    _alpha_tol = 1e-08
    _final_res = None
    _prev_res = None
    _curr_res = 4
    _scale_stage = int(np.log2(_curr_res)) - 1
    _fmap_prev = None
    _fmap = min(int(FMAP_BASE / 2 ** _scale_stage), FMAP_MAX)
    _scale_inc_metadata_updated = False
    _fade_in_phase = False

    @classmethod
    def reset_state(cls):
        cls._alpha = 1
        cls._alpha_tol = 1e-08
        cls._prev_res = None
        cls._curr_res = 4
        if cls._final_res is not None:
            assert cls._curr_res <= cls._final_res
        cls._scale_stage = int(np.log2(cls._curr_res)) - 1
        cls._fmap_prev = None
        cls._fmap = min(int(FMAP_BASE / 2 ** cls._scale_stage), FMAP_MAX)
        cls._scale_inc_metadata_updated = False
        cls._fade_in_phase = False

    def __init__(self, final_res):
        # Mirrors `self.cls_base = self.__class__.__base__` storage-on-base.
        self.cls_base = self.__class__.__base__
        self.final_res = final_res
        assert self.curr_res <= self.final_res

    def increase_scale(self):
        self.prev_res = self.curr_res
        self.curr_res = int(2 ** (int(np.log2(self.curr_res)) + 1))
        self.scale_stage = int(np.log2(self.curr_res)) - 1
        self.fmap_prev = self.fmap
        self.fmap = self.get_fmap(scale_stage=self.scale_stage)
        self.scale_inc_metadata_updated = True
        self.fade_in_phase = True

    def get_fmap(self, scale_stage):
        return min(int(FMAP_BASE / 2 ** scale_stage), FMAP_MAX)

    # -- properties (stored on the base class, as in the PyTorch code) -------
    @property
    def fade_in_phase(self):
        return self.cls_base._fade_in_phase

    @fade_in_phase.setter
    def fade_in_phase(self, v):
        self.cls_base._fade_in_phase = v

    @property
    def scale_inc_metadata_updated(self):
        return self.cls_base._scale_inc_metadata_updated

    @scale_inc_metadata_updated.setter
    def scale_inc_metadata_updated(self, v):
        self.cls_base._scale_inc_metadata_updated = v

    @property
    def fmap(self):
        return self.cls_base._fmap

    @fmap.setter
    def fmap(self, v):
        self.cls_base._fmap = v

    @property
    def fmap_prev(self):
        return self.cls_base._fmap_prev

    @fmap_prev.setter
    def fmap_prev(self, v):
        self.cls_base._fmap_prev = v

    @property
    def scale_stage(self):
        return self.cls_base._scale_stage

    @scale_stage.setter
    def scale_stage(self, v):
        self.cls_base._scale_stage = v

    @property
    def curr_res(self):
        return self.cls_base._curr_res

    @curr_res.setter
    def curr_res(self, v):
        self.cls_base._curr_res = v

    @property
    def final_res(self):
        return self.cls_base._final_res

    @final_res.setter
    def final_res(self, v):
        self.cls_base._final_res = v

    @property
    def prev_res(self):
        return self.cls_base._prev_res

    @prev_res.setter
    def prev_res(self, v):
        self.cls_base._prev_res = v

    @property
    def alpha_tol(self):
        return self.cls_base._alpha_tol

    @alpha_tol.setter
    def alpha_tol(self, v):
        self.cls_base._alpha_tol = v

    @property
    def alpha(self):
        return self.cls_base._alpha

    @alpha.setter
    def alpha(self, new_alpha):
        if not 0.0 <= new_alpha < 1.0 + self.alpha_tol:
            raise ValueError('Input alpha parameter must be in the range [0,1].')
        if 1.0 - self.alpha_tol < new_alpha < 1.0 + self.alpha_tol:
            self.fade_in_phase = False
            self.cls_base._alpha = 1
        else:
            self.cls_base._alpha = new_alpha

    @abstractmethod
    def forward(self, x):
        raise NotImplementedError('Can only call `forward` on valid subclasses.')


# ----------------------------------------------------------------------------
# Minimal concrete subclass: forward = ProGAN fade-in blend (Pallas kernel).
# ----------------------------------------------------------------------------
class ProGANFadeIn(ProGAN):
    def forward(self, x_new, x_old):
        if self.fade_in_phase:
            return fade_in_blend(x_new, x_old, float(self.alpha))
        # alpha == 1 outside fade-in: identity on the new-resolution path.
        # Short-circuit — no kernel launch, no HBM traffic.
        return x_new


if __name__ == "__main__":
    ProGAN.reset_state()
    model = ProGANFadeIn(final_res=8)
    model.increase_scale()          # curr_res 4 -> 8, enters fade-in phase
    model.alpha = 0.3               # mid fade-in

    key = jax.random.PRNGKey(0)
    k1, k2, k3, k4 = jax.random.split(key, 4)

    # --- Small test (NCHW, matches the module's convention). ---------------
    x_new = jax.random.normal(k1, (2, 4, 16, 16), dtype=jnp.float32)
    x_old = jax.random.normal(k2, (2, 4, 16, 16), dtype=jnp.float32)

    out = model.forward(x_new, x_old)
    out = jax.block_until_ready(out)

    ref = 0.3 * x_new + (1.0 - 0.3) * x_old
    assert out.shape == (2, 4, 16, 16)
    assert jnp.allclose(out, ref, atol=1e-6), "mismatch vs reference blend (small)"

    # --- Larger test: exercises a multi-step tiled grid (grid > 1). --------
    x_new_big = jax.random.normal(k3, (2, 32, 128, 128), dtype=jnp.float32)
    x_old_big = jax.random.normal(k4, (2, 32, 128, 128), dtype=jnp.float32)

    out_big = fade_in_blend(x_new_big, x_old_big, 0.3)
    out_big = jax.block_until_ready(out_big)

    ref_big = 0.3 * x_new_big + 0.7 * x_old_big
    assert out_big.shape == x_new_big.shape
    assert jnp.allclose(out_big, ref_big, atol=1e-6), "mismatch vs reference blend (big)"

    # --- Non-fade-in path: alpha snaps to 1, forward is a pass-through. ----
    model.alpha = 1.0
    assert not model.fade_in_phase
    out_id = model.forward(x_new, x_old)
    out_id = jax.block_until_ready(out_id)
    assert jnp.allclose(out_id, x_new), "alpha==1 path must return x_new"

    print("KERNEL_OK")
</pallas_src>

<mosaic_0001>
module attributes {stable_mosaic.version = 11 : i64} {
  func.func @_fade_in_kernel(%arg0: i32, %arg1: memref<1xf32, #tpu.memory_space<smem>>, %arg2: memref<8x1024xf32, #tpu.memory_space<vmem>>, %arg3: memref<8x1024xf32, #tpu.memory_space<vmem>>, %arg4: memref<8x1024xf32, #tpu.memory_space<vmem>>) attributes {dimension_semantics = [#tpu.dimension_semantics<parallel>], iteration_bounds = array<i64: 1>, scalar_prefetch = 0 : i64, scratch_operands = 0 : i64, tpu.core_type = #tpu.core_type<tc>, window_params = [{transform_indices = @transform_0, window_bounds = array<i64: 1>}, {transform_indices = @transform_1, window_bounds = array<i64: 8, 1024>}, {transform_indices = @transform_2, window_bounds = array<i64: 8, 1024>}, {transform_indices = @transform_3, window_bounds = array<i64: 8, 1024>}]} {
    %c0 = arith.constant 0 : index
    %0 = memref.load %arg1[%c0] : memref<1xf32, #tpu.memory_space<smem>>
    %c0_0 = arith.constant 0 : index
    %c0_1 = arith.constant 0 : index
    %1 = vector.load %arg2[%c0_0, %c0_1] : memref<8x1024xf32, #tpu.memory_space<vmem>>, vector<8x1024xf32>
    %c0_2 = arith.constant 0 : index
    %c0_3 = arith.constant 0 : index
    %2 = vector.load %arg3[%c0_2, %c0_3] : memref<8x1024xf32, #tpu.memory_space<vmem>>, vector<8x1024xf32>
    %3 = vector.broadcast %0 : f32 to vector<8x1024xf32>
    %4 = arith.mulf %3, %1 : vector<8x1024xf32>
    %cst = arith.constant 1.000000e+00 : f32
    %5 = arith.subf %cst, %0 : f32
    %6 = vector.broadcast %5 : f32 to vector<8x1024xf32>
    %7 = arith.mulf %6, %2 : vector<8x1024xf32>
    %8 = arith.addf %4, %7 : vector<8x1024xf32>
    %c0_4 = arith.constant 0 : index
    %c0_5 = arith.constant 0 : index
    %9 = vector.load %arg4[%c0_4, %c0_5] : memref<8x1024xf32, #tpu.memory_space<vmem>>, vector<8x1024xf32>
    tpu.vector_store %arg4[%c0_4, %c0_5], %8 {strides = array<i32>} : memref<8x1024xf32, #tpu.memory_space<vmem>>, vector<8x1024xf32>,
    return
  }
  func.func @transform_0(%arg0: i32) -> i32 {
    %c0_i32 = arith.constant 0 : i32
    %c0_i32_0 = arith.constant 0 : i32
    return %c0_i32 : i32
  }
  func.func @transform_1(%arg0: i32) -> (i32, i32) {
    %c0_i32 = arith.constant 0 : i32
    %c0_i32_0 = arith.constant 0 : i32
    return %arg0, %c0_i32 : i32, i32
  }
  func.func @transform_2(%arg0: i32) -> (i32, i32) {
    %c0_i32 = arith.constant 0 : i32
    %c0_i32_0 = arith.constant 0 : i32
    return %arg0, %c0_i32 : i32, i32
  }
  func.func @transform_3(%arg0: i32) -> (i32, i32) {
    %c0_i32 = arith.constant 0 : i32
    %c0_i32_0 = arith.constant 0 : i32
    return %arg0, %c0_i32 : i32, i32
  }
}

</mosaic_0001>

<llo_original>
// kernel: tpu_custom_call.1
$region0: #{tpu_custom_call.1}
  #allocation0 [shape = 'u32[]', space=smem, size = 0x4, offset = 0x4, fixed_abs, tag = 'smem constant byte address 0x4 - core index']
  #allocation1 [shape = 'u32[144,128]{1,0:T(1,128)}', space=vmem, size = 0x12000, scoped, tag = 'internal scratch']
  #allocation2 [shape = 'f32[1]{0:T(128)S(6)}', space=smem, size = 0x200, scoped, tag = 'scoped memory for tpu_custom_call.1']
  %s0 = inlined_call_operand.<no memory space> [shape: f32[1], index: 0, kind: input, shape index: {}]
  %s1 = inlined_call_operand.hbm [shape: f32[8,1024], index: 1, kind: input, shape index: {}]
  %s2 = inlined_call_operand.hbm [shape: f32[8,1024], index: 2, kind: input, shape index: {}]
  %s3 = inlined_call_operand.hbm [shape: f32[8,1024], index: 3, kind: output, shape index: {}]
  %s4 = sld [smem:[#allocation0]]
  $region30: #{tpu_custom_call.1} parent=0
    _
  %s6 = ssub.s32 1, %s4
  %s7 = scalar_select 0, %s6, %s4
  %8 = sst [smem:[#allocation2]] %s0
  $region1: #{tpu_custom_call.1} parent=0
    #allocation3 [shape = 'u8[32768]{0}', space=vmem, size = 0x8000, scoped, tag = 'input window, operand 1, single buffered']
    #allocation4 [shape = 's32[1]{0}', space=sflag, size = 0x4, scoped, tag = 'scoped memory for tpu_custom_call.1']
    #allocation5 [shape = 's32[1]{0}', space=sflag, size = 0x4, scoped, tag = 'scoped memory for tpu_custom_call.1']
    #allocation6 [shape = 'u8[32768]{0}', space=vmem, size = 0x8000, scoped, tag = 'input window, operand 2, single buffered']
    #allocation7 [shape = 's32[1]{0}', space=sflag, size = 0x4, scoped, tag = 'scoped memory for tpu_custom_call.1']
    #allocation8 [shape = 'u8[32768]{0}', space=vmem, size = 0x8000, scoped, tag = 'output window, operand 0, single buffered']
    %9 = vsyncpa [#allocation4], 0
    %10 = vsyncpa [#allocation7], 0
    %11 = vsyncpa [#allocation5], 0
    // Predicated region
    $region2: #{tpu_custom_call.1} parent=1 // pred_check
      _
    $region3: #{tpu_custom_call.1} parent=1 // pred_check_branch
      %13 = sbr.rel (0) target = $region5
    $region4: #{tpu_custom_call.1} parent=1 // pred_region
      _
    $region5: #{tpu_custom_call.1} parent=1 // pred_fallthru
      _
    // Predicated region
    $region6: #{tpu_custom_call.1} parent=1 // pred_check
      _
    $region7: #{tpu_custom_call.1} parent=1 // pred_check_branch
      %15 = sbr.rel (0) target = $region9
    $region8: #{tpu_custom_call.1} parent=1 // pred_region
      %s17 = ssub.s32 1024, 1024
      %18 = vsyncadd [#allocation4], %s17
      %s20 = sshll.u32 [#allocation3], 4
      %s21 = int_to_ptr.vmem [resolvable:$true] %s20
      %23 = dma.hbm_to_vmem [thread:$0]  %s1, 1024, %s21, [#allocation4]
    $region9: #{tpu_custom_call.1} parent=1 // pred_fallthru
      _
    // Predicated region
    $region10: #{tpu_custom_call.1} parent=1 // pred_check
      _
    $region11: #{tpu_custom_call.1} parent=1 // pred_check_branch
      %25 = sbr.rel (0) target = $region13
    $region12: #{tpu_custom_call.1} parent=1 // pred_region
      %s27 = ssub.s32 1024, 1024
      %28 = vsyncadd [#allocation7], %s27
      %s30 = sshll.u32 [#allocation6], 4
      %s31 = int_to_ptr.vmem [resolvable:$true] %s30
      %33 = dma.hbm_to_vmem [thread:$0]  %s2, 1024, %s31, [#allocation7]
    $region13: #{tpu_custom_call.1} parent=1 // pred_fallthru
      _
    // Predicated region
    $region14: #{tpu_custom_call.1} parent=1 // pred_check
      _
    $region15: #{tpu_custom_call.1} parent=1 // pred_check_branch
      %35 = sbr.rel (0) target = $region17
    $region16: #{tpu_custom_call.1} parent=1 // pred_region
      %36 = dma.done [#allocation4], 1024
    $region17: #{tpu_custom_call.1} parent=1 // pred_fallthru
      _
    // Predicated region
    $region18: #{tpu_custom_call.1} parent=1 // pred_check
      _
    $region19: #{tpu_custom_call.1} parent=1 // pred_check_branch
      %38 = sbr.rel (0) target = $region21
    $region20: #{tpu_custom_call.1} parent=1 // pred_region
      %39 = dma.done [#allocation7], 1024
    $region21: #{tpu_custom_call.1} parent=1 // pred_fallthru
      _
    %s40 = sld [smem:[#allocation2]]
    %v41 = vld [vmem:[#allocation3] sm:$0xff]
    %v42 = vld [vmem:[#allocation3 + $0x8] sm:$0xff]
    %v43 = vld [vmem:[#allocation3 + $0x10] sm:$0xff]
    %v44 = vld [vmem:[#allocation3 + $0x18] sm:$0xff]
    %v45 = vld [vmem:[#allocation3 + $0x20] sm:$0xff]
    %v46 = vld [vmem:[#allocation3 + $0x28] sm:$0xff]
    %v47 = vld [vmem:[#allocation3 + $0x30] sm:$0xff]
    %v48 = vld [vmem:[#allocation3 + $0x38] sm:$0xff]
    %v49 = vld [vmem:[#allocation6] sm:$0xff]
    %v50 = vld [vmem:[#allocation6 + $0x8] sm:$0xff]
    %v51 = vld [vmem:[#allocation6 + $0x10] sm:$0xff]
    %v52 = vld [vmem:[#allocation6 + $0x18] sm:$0xff]
    %v53 = vld [vmem:[#allocation6 + $0x20] sm:$0xff]
    %v54 = vld [vmem:[#allocation6 + $0x28] sm:$0xff]
    %v55 = vld [vmem:[#allocation6 + $0x30] sm:$0xff]
    %v56 = vld [vmem:[#allocation6 + $0x38] sm:$0xff]
    %v57 = vstv %s40
    %v58 = vmul.f32 %v57, %v41
    %v59 = vmul.f32 %v57, %v42
    %v60 = vmul.f32 %v57, %v43
    %v61 = vmul.f32 %v57, %v44
    %v62 = vmul.f32 %v57, %v45
    %v63 = vmul.f32 %v57, %v46
    %v64 = vmul.f32 %v57, %v47
    %v65 = vmul.f32 %v57, %v48
    %s66 = ssub.f32 1.0, %s40
    %v67 = vstv %s66
    %v68 = vmul.f32 %v67, %v49
    %v69 = vmul.f32 %v67, %v50
    %v70 = vmul.f32 %v67, %v51
    %v71 = vmul.f32 %v67, %v52
    %v72 = vmul.f32 %v67, %v53
    %v73 = vmul.f32 %v67, %v54
    %v74 = vmul.f32 %v67, %v55
    %v75 = vmul.f32 %v67, %v56
    %v76 = vadd.f32 %v58, %v68
    %v77 = vadd.f32 %v59, %v69
    %v78 = vadd.f32 %v60, %v70
    %v79 = vadd.f32 %v61, %v71
    %v80 = vadd.f32 %v62, %v72
    %v81 = vadd.f32 %v63, %v73
    %v82 = vadd.f32 %v64, %v74
    %v83 = vadd.f32 %v65, %v75
    %84 = vst [vmem:[#allocation8] sm:$0xff] %v76
    %85 = vst [vmem:[#allocation8 + $0x8] sm:$0xff] %v77
    %86 = vst [vmem:[#allocation8 + $0x10] sm:$0xff] %v78
    %87 = vst [vmem:[#allocation8 + $0x18] sm:$0xff] %v79
    %88 = vst [vmem:[#allocation8 + $0x20] sm:$0xff] %v80
    %89 = vst [vmem:[#allocation8 + $0x28] sm:$0xff] %v81
    %90 = vst [vmem:[#allocation8 + $0x30] sm:$0xff] %v82
    %91 = vst [vmem:[#allocation8 + $0x38] sm:$0xff] %v83
    // Predicated region
    $region22: #{tpu_custom_call.1} parent=1 // pred_check
      _
    $region23: #{tpu_custom_call.1} parent=1 // pred_check_branch
      %93 = sbr.rel (0) target = $region25
    $region24: #{tpu_custom_call.1} parent=1 // pred_region
      %s95 = ssub.s32 1024, 1024
      %96 = vsyncadd [#allocation5], %s95
      %s98 = sshll.u32 [#allocation8], 4
      %s99 = int_to_ptr.vmem [resolvable:$true] %s98
      %101 = dma.vmem_to_hbm [thread:$0]  %s99, 1024, %s3, [#allocation5]
    $region25: #{tpu_custom_call.1} parent=1 // pred_fallthru
      _
    // Predicated region
    $region26: #{tpu_custom_call.1} parent=1 // pred_check
      _
    $region27: #{tpu_custom_call.1} parent=1 // pred_check_branch
      %103 = sbr.rel (0) target = $region29
    $region28: #{tpu_custom_call.1} parent=1 // pred_region
      %104 = dma.done [#allocation5], 1024
    $region29: #{tpu_custom_call.1} parent=1 // pred_fallthru
      _
    %105 = vsyncpa [#allocation4], 1
    %106 = vsyncpa [#allocation7], 1
    %107 = vsyncpa [#allocation5], 1

</llo_original>
